<compile_context>
chip_gen: v7x
topology: tpu7x:2x2x1
jax: 0.10.0
libtpu: 0.0.40
codegen_flags: <defaults>
</compile_context>

<pallas_src>
import functools

import numpy as np
import jax
import jax.numpy as jnp
from jax.experimental import pallas as pl
from jax.experimental.pallas import tpu as pltpu

# (src_type, relation_name, dst_type) -- exactly IERGCN.pos_build_graph's heterograph.
REL_DEFS = [
    ('all', 'alle', 'emotion'), ('all', 'allc', 'cause'), ('all', 'allp', 'pair'),
    ('cause', 'cc', 'cause'), ('emotion', 'ec', 'cause'), ('emotion', 'ee', 'emotion'),
    ('pair', 'pe', 'emotion'), ('pair', 'pc', 'cause'), ('pair', 'pp', 'pair'),
]
SRC_TYPES_L1 = ['all', 'cause', 'emotion', 'pair']   # X stacking order for layer 1
DST_TYPES = ['emotion', 'cause', 'pair']             # output stacking order (= layer-2 src order)

LANE = 128                     # lane-dense feature padding
SUBLANE = 16                   # bf16-safe sublane padding
MXU_DTYPE = jnp.bfloat16       # MXU operand dtype (f32 accumulation)


def _round_up(x, m):
    return ((x + m - 1) // m) * m


def _compiler_params(**kwargs):
    cls = getattr(pltpu, "CompilerParams", None)
    if cls is None:  # older jax fallback
        cls = pltpu.TPUCompilerParams
    return cls(**kwargs)


# ---------------------------------------------------------------------------
# Graph construction (mirrors IERGCN.dgl_adj_matrix_construction + pos_build_graph)
# Dense COUNT adjacency A[dst, src] (multi-edges, e.g. relation 'ee', count like DGL).
# ---------------------------------------------------------------------------
def build_graph_adjacency(seq_len, k):
    cau_len = 1
    p, e, c, c_u, c_v = [], [], [], [], []
    prs = 0
    for i in range(seq_len):
        for j in range(seq_len):
            if -k <= (j - i) <= k:          # pos = (j+1) - (i+1)
                p.append(prs); prs += 1
                e.append(i); c.append(j)
    for i in range(seq_len):
        for j in range(seq_len):
            if -cau_len <= (j - i) <= cau_len:
                c_u.append(i); c_v.append(j)
    num_pairs = len(p)
    all_node = [0] * seq_len
    all_e_node = list(range(seq_len))
    all_c_node = all_e_node
    all_p_node = [0] * num_pairs
    n_nodes = {'all': 1, 'emotion': seq_len, 'cause': seq_len, 'pair': num_pairs}
    edges = {                                  # rel -> (src_ids, dst_ids)
        'alle': (all_node, all_e_node), 'allc': (all_node, all_c_node), 'allp': (all_p_node, p),
        'cc': (c_u, c_v), 'ec': (e, c), 'ee': (e, e),
        'pe': (p, e), 'pc': (p, c), 'pp': (p, p),
    }
    adjs = {}
    for stype, rel, dtype in REL_DEFS:
        src, dst = edges[rel]
        a = np.zeros((n_nodes[dtype], n_nodes[stype]), np.float32)
        np.add.at(a, (np.asarray(dst), np.asarray(src)), 1.0)
        adjs[rel] = a
    return adjs, n_nodes


def normalize_and_stack_adjacency(adjs, n_pad):
    """Pre-normalize once (GraphConv norm='both', degrees clamped to >=1), zero-pad every
    relation to a common [n_pad, n_pad] and stack -> [R, n_pad, n_pad] (bf16)."""
    mats = []
    for stype, rel, dtype in REL_DEFS:
        a = adjs[rel]
        deg_out = np.maximum(a.sum(axis=0, keepdims=True), 1.0)   # src out-degree
        deg_in = np.maximum(a.sum(axis=1, keepdims=True), 1.0)    # dst in-degree
        a_norm = a / np.sqrt(deg_in) / np.sqrt(deg_out)
        buf = np.zeros((n_pad, n_pad), np.float32)
        buf[:a.shape[0], :a.shape[1]] = a_norm
        mats.append(buf)
    return jnp.asarray(np.stack(mats, 0), dtype=MXU_DTYPE)


# ---------------------------------------------------------------------------
# Per-layer relation schedule (grouped by destination type)
# ---------------------------------------------------------------------------
def build_layer_plan(avail_src_types, src_index):
    entries = []                                 # (dst_idx, src_idx, rel_idx, rel, first, last, 1/R)
    per_dst_rels = {}
    for d_idx, d in enumerate(DST_TYPES):
        rels = [(r_idx, s, rel) for r_idx, (s, rel, dd) in enumerate(REL_DEFS)
                if dd == d and s in avail_src_types]
        per_dst_rels[d] = [rel for _, _, rel in rels]
        n = len(rels)
        for k, (r_idx, s, rel) in enumerate(rels):
            entries.append((d_idx, src_index[s], r_idx, rel,
                            int(k == 0), int(k == n - 1), 1.0 / n))
    sched = dict(
        dst=jnp.asarray([e[0] for e in entries], jnp.int32),
        src=jnp.asarray([e[1] for e in entries], jnp.int32),
        rel=jnp.asarray([e[2] for e in entries], jnp.int32),
        first=jnp.asarray([e[4] for e in entries], jnp.int32),
        last=jnp.asarray([e[5] for e in entries], jnp.int32),
    )
    return sched, entries, per_dst_rels


def stack_layer_params(weights, biases, entries, per_dst_rels, fin_pad, fout_pad):
    """1/R mean folded into the weights; per-dst bias = mean_r b_r added in the epilogue."""
    ws = []
    for (_, _, _, rel, _, _, inv) in entries:
        w = weights[rel] * inv
        ws.append(jnp.pad(w, ((0, fin_pad - w.shape[0]), (0, fout_pad - w.shape[1]))))
    w_stack = jnp.stack(ws, 0).astype(MXU_DTYPE)                   # [S, fin_pad, fout_pad]
    bs = []
    for d in DST_TYPES:
        rels = per_dst_rels[d]
        b = sum(biases[rel] for rel in rels) / float(len(rels))
        bs.append(jnp.pad(b, (0, fout_pad - b.shape[0]))[None, :])
    b_stack = jnp.stack(bs, 0).astype(jnp.float32)                 # [n_dst, 1, fout_pad]
    return w_stack, b_stack


# ---------------------------------------------------------------------------
# Fused HeteroGraphConv layer kernel
# ---------------------------------------------------------------------------
def _hetero_layer_kernel(dst_ids, src_ids, rel_ids, first_flags, last_flags,
                         a_ref, x_ref, w_ref, b_ref, o_ref, acc_ref, *, apply_relu):
    """One (batch, dst-node-tile, relation) grid step.

    acc += A_norm_r @ X_src(r) @ (W_r / R_dst)   (bf16 operands, f32 accumulation)
    epilogue (last relation of this dst): + mean bias, optional ReLU, lane-dense store.
    """
    s = pl.program_id(2)

    @pl.when(first_flags[s] == 1)
    def _():
        acc_ref[...] = jnp.zeros_like(acc_ref)

    a = a_ref[...]                                    # [tile_n, n_pad]      bf16
    x = x_ref[...]                                    # [n_pad, fin_pad]     bf16
    w = w_ref[...]                                    # [fin_pad, fout_pad]  bf16
    h = jnp.dot(a, x, preferred_element_type=jnp.float32)              # MXU
    acc_ref[...] += jnp.dot(h.astype(w.dtype), w,
                            preferred_element_type=jnp.float32)        # MXU

    @pl.when(last_flags[s] == 1)
    def _():
        out = acc_ref[...] + b_ref[...]               # bias folded into the epilogue
        if apply_relu:
            out = jnp.maximum(out, 0.0)
        o_ref[...] = out.astype(o_ref.dtype)


def hetero_layer(x_all, a_stack, sched, w_stack, b_stack, *, tile_n, apply_relu, out_dtype):
    """x_all: [B, n_src_types, n_pad, fin_pad] -> [B, len(DST_TYPES), n_pad, fout_pad]."""
    B, _, n_pad, fin_pad = x_all.shape
    S, _, fout_pad = w_stack.shape
    num_tiles = n_pad // tile_n
    kern = functools.partial(_hetero_layer_kernel, apply_relu=apply_relu)
    grid_spec = pltpu.PrefetchScalarGridSpec(
        num_scalar_prefetch=5,
        grid=(B, num_tiles, S),
        in_specs=[
            pl.BlockSpec((None, tile_n, n_pad),
                         lambda b, i, s, dst, src, rel, fst, lst: (rel[s], i, 0)),
            pl.BlockSpec((None, None, n_pad, fin_pad),
                         lambda b, i, s, dst, src, rel, fst, lst: (b, src[s], 0, 0)),
            pl.BlockSpec((None, fin_pad, fout_pad),
                         lambda b, i, s, dst, src, rel, fst, lst: (s, 0, 0)),
            pl.BlockSpec((None, 1, fout_pad),
                         lambda b, i, s, dst, src, rel, fst, lst: (dst[s], 0, 0)),
        ],
        out_specs=pl.BlockSpec((None, None, tile_n, fout_pad),
                               lambda b, i, s, dst, src, rel, fst, lst: (b, dst[s], i, 0)),
        scratch_shapes=[pltpu.VMEM((tile_n, fout_pad), jnp.float32)],
    )
    return pl.pallas_call(
        kern,
        out_shape=jax.ShapeDtypeStruct((B, len(DST_TYPES), n_pad, fout_pad), out_dtype),
        grid_spec=grid_spec,
        compiler_params=_compiler_params(
            dimension_semantics=("parallel", "parallel", "arbitrary")),
    )(sched['dst'], sched['src'], sched['rel'], sched['first'], sched['last'],
      a_stack, x_all, w_stack, b_stack)


# ---------------------------------------------------------------------------
# Batched lane-dense Linear kernel (pairs_input / output-head embeddings)
# ---------------------------------------------------------------------------
def _linear_kernel(x_ref, w_ref, b_ref, o_ref, *, apply_relu):
    out = jnp.dot(x_ref[...], w_ref[...], preferred_element_type=jnp.float32)
    out = out + b_ref[...]
    if apply_relu:
        out = jnp.maximum(out, 0.0)
    o_ref[...] = out.astype(o_ref.dtype)


def linear(x, w, b, *, apply_relu, out_dtype):
    """x: [B, n, fin_pad] (bf16), w: [fin_pad, fout_pad] (bf16), b: [1, fout_pad] (f32)."""
    B, n, fin_pad = x.shape
    fout_pad = w.shape[1]
    kern = functools.partial(_linear_kernel, apply_relu=apply_relu)
    return pl.pallas_call(
        kern,
        out_shape=jax.ShapeDtypeStruct((B, n, fout_pad), out_dtype),
        grid=(B,),
        in_specs=[
            pl.BlockSpec((None, n, fin_pad), lambda b_: (b_, 0, 0)),
            pl.BlockSpec((fin_pad, fout_pad), lambda b_: (0, 0)),
            pl.BlockSpec((1, fout_pad), lambda b_: (0, 0)),
        ],
        out_specs=pl.BlockSpec((None, n, fout_pad), lambda b_: (b_, 0, 0)),
        compiler_params=_compiler_params(dimension_semantics=("parallel",)),
    )(x, w, b)


# ---------------------------------------------------------------------------
# Full IERGCN forward (Pallas path)
# ---------------------------------------------------------------------------
def _pad2d(x, rows, cols):
    return jnp.pad(x, ((0, rows - x.shape[0]), (0, cols - x.shape[1])))


def _pad_feat(x, rows, cols):           # [B, r, c] -> [B, rows, cols]
    return jnp.pad(x, ((0, 0), (0, rows - x.shape[1]), (0, cols - x.shape[2])))


def ier_forward_pallas(couples_pos_emo, doc_sents_he, doc_sents_hc, all_cls,
                       params, adjs, n_nodes, *, in_feats, hid_feats, out_feats):
    num_pairs = n_nodes['pair']
    n_max = max(n_nodes.values())
    if n_max <= 256:
        n_pad = max(_round_up(n_max, SUBLANE), SUBLANE)
        tile_n = n_pad
    else:
        n_pad = _round_up(n_max, 256)
        tile_n = 256

    fin_pad = _round_up(in_feats, LANE)
    hid_pad = _round_up(hid_feats, LANE)
    fout_pad = _round_up(out_feats, LANE)
    pair_in_pad = _round_up(couples_pos_emo.shape[-1], LANE)

    # Static prep shared by both layers / all batch items / all RGCN modules.
    a_stack = normalize_and_stack_adjacency(adjs, n_pad)
    src_index_l1 = {t: i for i, t in enumerate(SRC_TYPES_L1)}
    src_index_l2 = {t: i for i, t in enumerate(DST_TYPES)}
    sched1, entries1, per_dst1 = build_layer_plan(set(SRC_TYPES_L1), src_index_l1)
    sched2, entries2, per_dst2 = build_layer_plan(set(DST_TYPES), src_index_l2)   # no 'all' src

    # pairs_input_embedding (one call for the whole batch, lane-dense)
    w_in = _pad2d(params['w_in'], pair_in_pad, fin_pad).astype(MXU_DTYPE)
    b_in = _pad2d(params['b_in'][None, :], 1, fin_pad).astype(jnp.float32)
    pair_x = linear(_pad_feat(couples_pos_emo, n_pad, pair_in_pad).astype(MXU_DTYPE),
                    w_in, b_in, apply_relu=False, out_dtype=MXU_DTYPE)     # [B, n_pad, fin_pad]

    x_all_l1 = jnp.stack([
        _pad_feat(all_cls[:, None, :], n_pad, fin_pad).astype(MXU_DTYPE),  # 'all'
        _pad_feat(doc_sents_hc, n_pad, fin_pad).astype(MXU_DTYPE),         # 'cause'
        _pad_feat(doc_sents_he, n_pad, fin_pad).astype(MXU_DTYPE),         # 'emotion'
        pair_x,                                                            # 'pair'
    ], axis=1)                                                             # [B, 4, n_pad, fin_pad]

    pred = None
    for layer_params in params['rgcn']:
        w1, b1 = stack_layer_params(layer_params['w1'], layer_params['b1'],
                                    entries1, per_dst1, fin_pad, hid_pad)
        w2, b2 = stack_layer_params(layer_params['w2'], layer_params['b2'],
                                    entries2, per_dst2, hid_pad, fout_pad)
        # As in the reference code, every RGCN module consumes the ORIGINAL node features and
        # only the last module's prediction is used.
        h = hetero_layer(x_all_l1, a_stack, sched1, w1, b1,
                         tile_n=tile_n, apply_relu=True, out_dtype=MXU_DTYPE)
        pred = hetero_layer(h, a_stack, sched2, w2, b2,
                            tile_n=tile_n, apply_relu=False, out_dtype=jnp.float32)

    pair_out = pred[:, DST_TYPES.index('pair')]                            # [B, n_pad, fout_pad]

    w_o1 = _pad2d(params['w_o1'], fout_pad, fout_pad).astype(MXU_DTYPE)
    b_o1 = _pad2d(params['b_o1'][None, :], 1, fout_pad).astype(jnp.float32)
    w_o2 = _pad2d(params['w_o2'], fout_pad, LANE).astype(MXU_DTYPE)
    b_o2 = _pad2d(params['b_o2'][None, :], 1, LANE).astype(jnp.float32)

    hidden_p = linear(pair_out.astype(MXU_DTYPE), w_o1, b_o1,
                      apply_relu=True, out_dtype=MXU_DTYPE)
    logits = linear(hidden_p, w_o2, b_o2, apply_relu=False, out_dtype=jnp.float32)
    return logits[:, :num_pairs, 0]                                        # [B, num_pairs]


# ---------------------------------------------------------------------------
# Pure-JAX f32 reference (mirrors the PyTorch module; used only for the check)
# ---------------------------------------------------------------------------
def _ref_graphconv(a, x, w, b):
    deg_out = jnp.maximum(a.sum(axis=0, keepdims=True), 1.0)
    deg_in = jnp.maximum(a.sum(axis=1, keepdims=True), 1.0)
    a_norm = a / jnp.sqrt(deg_in) / jnp.sqrt(deg_out)
    return (a_norm @ x) @ w + b[None, :]


def _ref_hetero_layer(adjs, feats, weights, biases, apply_relu):
    per_dst = {}
    for stype, rel, dtype in REL_DEFS:
        if stype not in feats:                      # DGL skips relations with missing src feats
            continue
        per_dst.setdefault(dtype, []).append(
            _ref_graphconv(jnp.asarray(adjs[rel]), feats[stype], weights[rel], biases[rel]))
    out = {}
    for dtype, outs in per_dst.items():
        m = sum(outs) / float(len(outs))
        out[dtype] = jnp.maximum(m, 0.0) if apply_relu else m
    return out


def ier_forward_reference(couples_pos_emo, doc_sents_he, doc_sents_hc, all_cls, params, adjs):
    preds = []
    for i in range(doc_sents_he.shape[0]):
        pair_x = couples_pos_emo[i] @ params['w_in'] + params['b_in']
        feats = {'all': all_cls[i][None, :], 'emotion': doc_sents_he[i],
                 'cause': doc_sents_hc[i], 'pair': pair_x}
        pred = None
        for layer in params['rgcn']:
            h = _ref_hetero_layer(adjs, feats, layer['w1'], layer['b1'], True)
            pred = _ref_hetero_layer(adjs, h, layer['w2'], layer['b2'], False)
        hp = jnp.maximum(pred['pair'] @ params['w_o1'] + params['b_o1'], 0.0)
        preds.append((hp @ params['w_o2'] + params['b_o2'])[:, 0])
    return jnp.stack(preds, 0)


# ---------------------------------------------------------------------------
# Parameters
# ---------------------------------------------------------------------------
def init_params(key, in_feats, hid_feats, out_feats, pair_in_dim, rgcn_layers):
    def dense(k, fan_in, fan_out):
        k1, k2 = jax.random.split(k)
        limit = (6.0 / (fan_in + fan_out)) ** 0.5
        w = jax.random.uniform(k1, (fan_in, fan_out), jnp.float32, -limit, limit)
        b = 0.1 * jax.random.normal(k2, (fan_out,), jnp.float32)
        return w, b

    params = {}
    key, k = jax.random.split(key)
    params['w_in'], params['b_in'] = dense(k, pair_in_dim, in_feats)
    params['rgcn'] = []
    for _ in range(rgcn_layers):
        layer = {'w1': {}, 'b1': {}, 'w2': {}, 'b2': {}}
        for _, rel, _ in REL_DEFS:
            key, k1, k2 = jax.random.split(key, 3)
            layer['w1'][rel], layer['b1'][rel] = dense(k1, in_feats, hid_feats)
            layer['w2'][rel], layer['b2'][rel] = dense(k2, hid_feats, out_feats)
        params['rgcn'].append(layer)
    key, k1, k2 = jax.random.split(key, 3)
    params['w_o1'], params['b_o1'] = dense(k1, out_feats, out_feats)
    params['w_o2'], params['b_o2'] = dense(k2, out_feats, 1)
    return params


# ---------------------------------------------------------------------------
if __name__ == "__main__":
    batch_size, seq_len, K = 2, 8, 2
    in_feats, hid_feats, out_feats = 16, 32, 8
    pos_emb_dim, emo_emb_dim = 8, 8
    pair_in_dim = 2 * in_feats + pos_emb_dim + emo_emb_dim
    rgcn_layers = 1

    adjs, n_nodes = build_graph_adjacency(seq_len, K)
    num_pairs = n_nodes['pair']

    root = jax.random.PRNGKey(0)
    k_he, k_hc, k_all, k_pair, k_param = jax.random.split(root, 5)
    doc_sents_he = jax.random.normal(k_he, (batch_size, seq_len, in_feats), jnp.float32)
    doc_sents_hc = jax.random.normal(k_hc, (batch_size, seq_len, in_feats), jnp.float32)
    all_cls = jax.random.normal(k_all, (batch_size, in_feats), jnp.float32)
    couples_pos_emo = jax.random.normal(k_pair, (batch_size, num_pairs, pair_in_dim), jnp.float32)
    params = init_params(k_param, in_feats, hid_feats, out_feats, pair_in_dim, rgcn_layers)

    out = ier_forward_pallas(couples_pos_emo, doc_sents_he, doc_sents_hc, all_cls,
                             params, adjs, n_nodes,
                             in_feats=in_feats, hid_feats=hid_feats, out_feats=out_feats)
    out = jax.block_until_ready(out)

    ref = ier_forward_reference(couples_pos_emo, doc_sents_he, doc_sents_hc, all_cls,
                                params, adjs)
    assert out.shape == (batch_size, num_pairs), out.shape
    err = float(jnp.max(jnp.abs(out - ref)))
    # bf16 MXU operands (f32 accumulation) -> allow a few e-2 error vs the f32 reference.
    assert jnp.allclose(out, ref, atol=3e-2, rtol=3e-2), f"max abs err {err}"
    print("KERNEL_OK")
</pallas_src>

<mosaic_0001>
module attributes {stable_mosaic.version = 11 : i64} {
  func.func @_linear_kernel(%arg0: i32, %arg1: memref<1x48x128xbf16, #tpu.memory_space<vmem>>, %arg2: memref<128x128xbf16, #tpu.memory_space<vmem>>, %arg3: memref<1x128xf32, #tpu.memory_space<vmem>>, %arg4: memref<1x48x128xbf16, #tpu.memory_space<vmem>>) attributes {dimension_semantics = [#tpu.dimension_semantics<parallel>], iteration_bounds = array<i64: 2>, scalar_prefetch = 0 : i64, scratch_operands = 0 : i64, tpu.core_type = #tpu.core_type<tc>, window_params = [{transform_indices = @transform_0, window_bounds = array<i64: 1, 48, 128>}, {pipeline_mode = #tpu.pipeline_mode<synchronous>, transform_indices = @transform_1, window_bounds = array<i64: 128, 128>}, {pipeline_mode = #tpu.pipeline_mode<synchronous>, transform_indices = @transform_2, window_bounds = array<i64: 1, 128>}, {transform_indices = @transform_3, window_bounds = array<i64: 1, 48, 128>}]} {
    %c0 = arith.constant 0 : index
    %c0_0 = arith.constant 0 : index
    %c0_1 = arith.constant 0 : index
    %0 = vector.load %arg1[%c0, %c0_0, %c0_1] : memref<1x48x128xbf16, #tpu.memory_space<vmem>>, vector<1x48x128xbf16>
    %1 = vector.shape_cast %0 : vector<1x48x128xbf16> to vector<48x128xbf16>
    %c0_2 = arith.constant 0 : index
    %c0_3 = arith.constant 0 : index
    %2 = vector.load %arg2[%c0_2, %c0_3] : memref<128x128xbf16, #tpu.memory_space<vmem>>, vector<128x128xbf16>
    %cst = arith.constant dense<0.000000e+00> : vector<48x128xf32>
    %3 = tpu.matmul %1, %2, %cst {dimension_numbers = #tpu.dot_dimension_numbers<[1], [0], [0], [1], [0, 0, 1, 1], [], []>} : vector<48x128xbf16>, vector<128x128xbf16>, vector<48x128xf32> -> vector<48x128xf32>
    %c0_4 = arith.constant 0 : index
    %c0_5 = arith.constant 0 : index
    %4 = vector.load %arg3[%c0_4, %c0_5] : memref<1x128xf32, #tpu.memory_space<vmem>>, vector<1x128xf32>
    %5 = vector.broadcast %4 : vector<1x128xf32> to vector<48x128xf32>
    %6 = arith.addf %3, %5 : vector<48x128xf32>
    %7 = arith.truncf %6 : vector<48x128xf32> to vector<48x128xbf16>
    %c0_6 = arith.constant 0 : index
    %c0_7 = arith.constant 0 : index
    %c0_8 = arith.constant 0 : index
    %8 = vector.load %arg4[%c0_6, %c0_7, %c0_8] : memref<1x48x128xbf16, #tpu.memory_space<vmem>>, vector<1x48x128xbf16>
    %9 = vector.shape_cast %8 : vector<1x48x128xbf16> to vector<48x128xbf16>
    %10 = vector.shape_cast %7 : vector<48x128xbf16> to vector<1x48x128xbf16>
    tpu.vector_store %arg4[%c0_6, %c0_7, %c0_8], %10 {strides = array<i32>} : memref<1x48x128xbf16, #tpu.memory_space<vmem>>, vector<1x48x128xbf16>,
    return
  }
  func.func @transform_0(%arg0: i32) -> (i32, i32, i32) {
    %c0_i32 = arith.constant 0 : i32
    %c0_i32_0 = arith.constant 0 : i32
    %c0_i32_1 = arith.constant 0 : i32
    return %arg0, %c0_i32, %c0_i32_0 : i32, i32, i32
  }
  func.func @transform_1(%arg0: i32) -> (i32, i32) {
    %c0_i32 = arith.constant 0 : i32
    %c0_i32_0 = arith.constant 0 : i32
    %c0_i32_1 = arith.constant 0 : i32
    return %c0_i32, %c0_i32_0 : i32, i32
  }
  func.func @transform_2(%arg0: i32) -> (i32, i32) {
    %c0_i32 = arith.constant 0 : i32
    %c0_i32_0 = arith.constant 0 : i32
    %c0_i32_1 = arith.constant 0 : i32
    return %c0_i32, %c0_i32_0 : i32, i32
  }
  func.func @transform_3(%arg0: i32) -> (i32, i32, i32) {
    %c0_i32 = arith.constant 0 : i32
    %c0_i32_0 = arith.constant 0 : i32
    %c0_i32_1 = arith.constant 0 : i32
    return %arg0, %c0_i32, %c0_i32_0 : i32, i32, i32
  }
}

</mosaic_0001>

<llo_original>
// kernel: tpu_custom_call.1
$region0: #{tpu_custom_call.1}
  #allocation0 [shape = 'u32[]', space=smem, size = 0x4, offset = 0x4, fixed_abs, tag = 'smem constant byte address 0x4 - core index']
  #allocation1 [shape = 'u32[144,128]{1,0:T(1,128)}', space=vmem, size = 0x12000, scoped, tag = 'internal scratch']
  %s0 = inlined_call_operand.hbm [shape: bf16[2,48,128], index: 0, kind: input, shape index: {}]
  %s1 = inlined_call_operand.hbm [shape: bf16[128,128], index: 1, kind: input, shape index: {}]
  %s2 = inlined_call_operand.vmem [shape: f32[1,128], index: 2, kind: input, shape index: {}]
  %s3 = inlined_call_operand.hbm [shape: bf16[2,48,128], index: 3, kind: output, shape index: {}]
  %s4 = sld [smem:[#allocation0]]
  $region53: #{tpu_custom_call.1} parent=0
    _
  %s6 = ssub.s32 1, %s4
  %s7 = scalar_select 0, %s6, %s4
  $region1: #{tpu_custom_call.1} parent=0
    #allocation2 [shape = 'u8[24576]{0}', space=vmem, size = 0x6000, scoped, tag = 'input window, operand 0']
    #allocation3 [shape = 's32[2]{0}', space=sflag, size = 0x8, scoped, tag = 'scoped memory for tpu_custom_call.1']
    #allocation4 [shape = 's32[2]{0}', space=sflag, size = 0x8, scoped, tag = 'scoped memory for tpu_custom_call.1']
    #allocation5 [shape = 'u8[32768]{0}', space=vmem, size = 0x8000, scoped, tag = 'input window, operand 1, single buffered']
    #allocation6 [shape = 's32[1]{0}', space=sflag, size = 0x4, scoped, tag = 'scoped memory for tpu_custom_call.1']
    #allocation7 [shape = 'u8[24576]{0}', space=vmem, size = 0x6000, scoped, tag = 'output window, operand 0']
    %8 = vsyncpa [#allocation3], 0
    %s9 = scalar_lea.sflag [#allocation3], 1
    %10 = vsyncpa %s9, 0
    %11 = vsyncpa [#allocation6], 0
    %12 = vsyncpa [#allocation4], 0
    %s13 = scalar_lea.sflag [#allocation4], 1
    %14 = vsyncpa %s13, 0
    loop: start=0, step=1, limit=4
    $region2: #{tpu_custom_call.1} parent=1 // loop_pre_header
      _
    $region3: #{tpu_custom_call.1} parent=1 // loop_header
      %s16 = sphi 0, %s20
      %p17 = scmp.ge.s32.totalorder %s16, 4
      %s26 = sphi 0, %s28
      %s29 = sphi 0, %s26
      %s30 = sphi 0, %s29
      %s46 = sphi 0, %s30
      %s50 = sphi 0, %s50
      %s52 = sphi 0, %s50
      %s53 = sphi 0, %s52
      %s67 = sphi 0, %s53
      %s71 = sphi 0, %s71
      %s73 = sphi 0, %s71
      %s74 = sphi 0, %s73
      %s88 = sphi 0, %s74
      %s94 = sphi 0, %s96
      %s97 = sphi 0, %s94
      %s98 = sphi 0, %s97
      %s114 = sphi 0, %s98
    $region4: #{tpu_custom_call.1} parent=1 // loop_header_branch
      %19 = sbr.rel (%p17) target = $region8
    $region5: #{tpu_custom_call.1} parent=1 // loop_body
      %s21 = ssub.s32 %s16, 1
      %s22 = ssub.s32 %s16, 2
      %s23 = sadd.s32 %s16, 1
      %s24 = ssub.s32 %s16, %s23
      %p25 = scmp.eq.s32.totalorder %s24, 0
      %s27 = sadd.s32 %s26, 1
      %s28 = scalar_select %p25, %s26, %s27
      %p31 = pneg %p25
      %p32 = scmp.eq.s32.totalorder %s16, 1
      %p33 = por %p31, %p32
      %p34 = scmp.ne.s32.totalorder %s26, %s29
      %p35 = scmp.eq.s32.totalorder %s16, 0
      %p36 = por %p34, %p35
      %p37 = scmp.ne.s32.totalorder %s26, %s29
      %p38 = scmp.eq.s32.totalorder %s21, 1
      %p39 = por %p37, %p38
      %p40 = scmp.ne.s32.totalorder %s29, %s30
      %p41 = scmp.eq.s32.totalorder %s21, 0
      %p42 = por %p40, %p41
      %p43 = scmp.ne.s32.totalorder %s29, %s30
      %p44 = scmp.eq.s32.totalorder %s22, 1
      %p45 = por %p43, %p44
      %p47 = scmp.ne.s32.totalorder %s30, %s46
      %p48 = scmp.eq.s32.totalorder %s22, 0
      %p49 = por %p47, %p48
      %s51 = sadd.s32 %s50, 1
      %p54 = scmp.eq.s32.totalorder %s16, 1
      %p55 = scmp.ne.s32.totalorder %s50, %s52
      %p56 = scmp.eq.s32.totalorder %s16, 0
      %p57 = por %p55, %p56
      %p58 = scmp.ne.s32.totalorder %s50, %s52
      %p59 = scmp.eq.s32.totalorder %s21, 1
      %p60 = por %p58, %p59
      %p61 = scmp.ne.s32.totalorder %s52, %s53
      %p62 = scmp.eq.s32.totalorder %s21, 0
      %p63 = por %p61, %p62
      %p64 = scmp.ne.s32.totalorder %s52, %s53
      %p65 = scmp.eq.s32.totalorder %s22, 1
      %p66 = por %p64, %p65
      %p68 = scmp.ne.s32.totalorder %s53, %s67
      %p69 = scmp.eq.s32.totalorder %s22, 0
      %p70 = por %p68, %p69
      %s72 = sadd.s32 %s71, 1
      %p75 = scmp.eq.s32.totalorder %s16, 1
      %p76 = scmp.ne.s32.totalorder %s71, %s73
      %p77 = scmp.eq.s32.totalorder %s16, 0
      %p78 = por %p76, %p77
      %p79 = scmp.ne.s32.totalorder %s71, %s73
      %p80 = scmp.eq.s32.totalorder %s21, 1
      %p81 = por %p79, %p80
      %p82 = scmp.ne.s32.totalorder %s73, %s74
      %p83 = scmp.eq.s32.totalorder %s21, 0
      %p84 = por %p82, %p83
      %p85 = scmp.ne.s32.totalorder %s73, %s74
      %p86 = scmp.eq.s32.totalorder %s22, 1
      %p87 = por %p85, %p86
      %p89 = scmp.ne.s32.totalorder %s74, %s88
      %p90 = scmp.eq.s32.totalorder %s22, 0
      %p91 = por %p89, %p90
      %s92 = ssub.s32 %s16, %s23
      %p93 = scmp.eq.s32.totalorder %s92, 0
      %s95 = sadd.s32 %s94, 1
      %s96 = scalar_select %p93, %s94, %s95
      %p99 = pneg %p93
      %p100 = scmp.eq.s32.totalorder %s16, 1
      %p101 = por %p99, %p100
      %p102 = scmp.ne.s32.totalorder %s94, %s97
      %p103 = scmp.eq.s32.totalorder %s16, 0
      %p104 = por %p102, %p103
      %p105 = scmp.ne.s32.totalorder %s94, %s97
      %p106 = scmp.eq.s32.totalorder %s21, 1
      %p107 = por %p105, %p106
      %p108 = scmp.ne.s32.totalorder %s97, %s98
      %p109 = scmp.eq.s32.totalorder %s21, 0
      %p110 = por %p108, %p109
      %p111 = scmp.ne.s32.totalorder %s97, %s98
      %p112 = scmp.eq.s32.totalorder %s22, 1
      %p113 = por %p111, %p112
      %p115 = scmp.ne.s32.totalorder %s98, %s114
      %p116 = scmp.eq.s32.totalorder %s22, 0
      %p117 = por %p115, %p116
      %p118 = scmp.le.s32.totalorder 1, %s16
      %p119 = scmp.lt.s32.totalorder %s16, 3
      %p120 = pnand %p118, %p119
      %p121 = pneg %p120
      // Predicated region
      $region9: #{tpu_custom_call.1} parent=5 // pred_check
        _
      $region10: #{tpu_custom_call.1} parent=5 // pred_check_branch
        %123 = sbr.rel (%p120) target = $region12
      $region11: #{tpu_custom_call.1} parent=5 // pred_region
        %s124 = ssub.s32 %s16, 1
        // Predicated region
        $region13: #{tpu_custom_call.1} parent=11 // pred_check
          %p125 = pneg %p63
        $region14: #{tpu_custom_call.1} parent=11 // pred_check_branch
          %127 = sbr.rel (%p125) target = $region16
        $region15: #{tpu_custom_call.1} parent=11 // pred_region
          %s129 = ssub.s32 1024, 1024
          %130 = vsyncadd [#allocation6], %s129
          %s131 = sshll.u32 [#allocation5], 4
          %s132 = int_to_ptr.vmem [resolvable:$true] %s131
          %137 = dma.hbm_to_vmem [thread:$0]  %s1, 1024, %s132, [#allocation6], 64, 64, 4
        $region16: #{tpu_custom_call.1} parent=11 // pred_fallthru
          _
        // Predicated region
        $region17: #{tpu_custom_call.1} parent=11 // pred_check
          %p138 = pneg %p84
        $region18: #{tpu_custom_call.1} parent=11 // pred_check_branch
          %140 = sbr.rel (%p138) target = $region20
        $region19: #{tpu_custom_call.1} parent=11 // pred_region
          _
        $region20: #{tpu_custom_call.1} parent=11 // pred_fallthru
          _
      $region12: #{tpu_custom_call.1} parent=5 // pred_fallthru
        _
      %p141 = scmp.lt.s32.totalorder %s16, 2
      // Predicated region
      $region21: #{tpu_custom_call.1} parent=5 // pred_check
        %p142 = pneg %p141
      $region22: #{tpu_custom_call.1} parent=5 // pred_check_branch
        %144 = sbr.rel (%p142) target = $region24
      $region23: #{tpu_custom_call.1} parent=5 // pred_region
        // Predicated region
        $region25: #{tpu_custom_call.1} parent=23 // pred_check
          %p145 = pneg %p36
        $region26: #{tpu_custom_call.1} parent=23 // pred_check_branch
          %147 = sbr.rel (%p145) target = $region28
        $region27: #{tpu_custom_call.1} parent=23 // pred_region
          %s148 = sand.u32 %s26, 1
          %s149 = scalar_lea.sflag [#allocation3], %s148
          %s150 = sand.u32 %s26, 1
          %s151 = smul.addr %s150, 24
          %s152 = scalar_lea.vmem [#allocation2], %s151
          %s154 = ssub.s32 384, 384
          %155 = vsyncadd %s149, %s154
          %s156 = smul.addr %s16, 6
          %s157 = smul.addr %s156, 64
          %s158 = scalar_lea.hbm %s0, %s157
          %s159 = sshll.u32 %s152, 4
          %s160 = int_to_ptr.vmem [resolvable:$true] %s159
          %165 = dma.hbm_to_vmem [thread:$0]  %s158, 384, %s160, %s149, 64, 64, 4
        $region28: #{tpu_custom_call.1} parent=23 // pred_fallthru
          _
      $region24: #{tpu_custom_call.1} parent=5 // pred_fallthru
        _
      %p166 = scmp.le.s32.totalorder 1, %s16
      %p167 = scmp.lt.s32.totalorder %s16, 3
      %p168 = pnand %p166, %p167
      %p169 = pneg %p168
      // Predicated region
      $region29: #{tpu_custom_call.1} parent=5 // pred_check
        _
      $region30: #{tpu_custom_call.1} parent=5 // pred_check_branch
        %171 = sbr.rel (%p168) target = $region32
      $region31: #{tpu_custom_call.1} parent=5 // pred_region
        %s172 = ssub.s32 %s16, 1
        %s173 = sand.u32 %s29, 1
        %s174 = scalar_lea.sflag [#allocation3], %s173
        %s175 = sand.u32 %s29, 1
        %s176 = smul.addr %s175, 24
        %s177 = scalar_lea.vmem [#allocation2], %s176
        // Predicated region
        $region33: #{tpu_custom_call.1} parent=31 // pred_check
          %p178 = pneg %p42
        $region34: #{tpu_custom_call.1} parent=31 // pred_check_branch
          %180 = sbr.rel (%p178) target = $region36
        $region35: #{tpu_custom_call.1} parent=31 // pred_region
          %181 = dma.done %s174, 384
        $region36: #{tpu_custom_call.1} parent=31 // pred_fallthru
          _
        // Predicated region
        $region37: #{tpu_custom_call.1} parent=31 // pred_check
          %p182 = pneg %p63
        $region38: #{tpu_custom_call.1} parent=31 // pred_check_branch
          %184 = sbr.rel (%p182) target = $region40
        $region39: #{tpu_custom_call.1} parent=31 // pred_region
          %185 = dma.done [#allocation6], 1024
        $region40: #{tpu_custom_call.1} parent=31 // pred_fallthru
          _
        %s186 = sand.u32 %s29, 1
        %s187 = scalar_lea.sflag [#allocation3], %s186
        %s188 = sand.u32 %s29, 1
        %s189 = smul.addr %s188, 24
        %s190 = scalar_lea.vmem [#allocation2], %s189
        %p191 = pneg %p42
        %p192 = pneg %p39
        %p193 = pneg %p63
        %p194 = pneg %p60
        %p195 = pneg %p84
        %p196 = pneg %p81
        %p197 = pneg %p110
        %p198 = pneg %p107
        %s199 = sand.u32 %s97, 1
        %s200 = scalar_lea.sflag [#allocation4], %s199
        %s201 = sand.u32 %s97, 1
        %s202 = smul.addr %s201, 24
        %s203 = scalar_lea.vmem [#allocation7], %s202
        %v205 = vld [vmem:[%s177] sm:$0xf]
        %v206 = vld [vmem:[%s177 + $0x4] sm:$0xf]
        %v207 = vld [vmem:[%s177 + $0x8] sm:$0xf]
        %v208 = vld [vmem:[%s177 + $0xc] sm:$0xf]
        %v209 = vld [vmem:[%s177 + $0x10] sm:$0xf]
        %v210 = vld [vmem:[%s177 + $0x14] sm:$0xf]
        %v211 = vld [vmem:[#allocation5] sm:$0xf]
        %v212 = vld [vmem:[#allocation5 + $0x4] sm:$0xf]
        %v213 = vld [vmem:[#allocation5 + $0x8] sm:$0xf]
        %v214 = vld [vmem:[#allocation5 + $0xc] sm:$0xf]
        %v215 = vld [vmem:[#allocation5 + $0x10] sm:$0xf]
        %v216 = vld [vmem:[#allocation5 + $0x14] sm:$0xf]
        %v217 = vld [vmem:[#allocation5 + $0x18] sm:$0xf]
        %v218 = vld [vmem:[#allocation5 + $0x1c] sm:$0xf]
        %v219 = vld [vmem:[#allocation5 + $0x20] sm:$0xf]
        %v220 = vld [vmem:[#allocation5 + $0x24] sm:$0xf]
        %v221 = vld [vmem:[#allocation5 + $0x28] sm:$0xf]
        %v222 = vld [vmem:[#allocation5 + $0x2c] sm:$0xf]
        %v223 = vld [vmem:[#allocation5 + $0x30] sm:$0xf]
        %v224 = vld [vmem:[#allocation5 + $0x34] sm:$0xf]
        %v225 = vld [vmem:[#allocation5 + $0x38] sm:$0xf]
        %v226 = vld [vmem:[#allocation5 + $0x3c] sm:$0xf]
        %v227 = vld [vmem:[%s2] sm:$0x1]
        %v229 = vlaneseq
        %v230 = vshrl.u32 %v229, 7
        %v231 = vsub.s32 0, %v230
        %v232 = vrot.slane %v227, %v231
        %v240 = vunpack.c.l.b16 %v205
        %v241 = vunpack.c.l.b16 %v206
        %v242 = vunpack.c.l.b16 %v207
        %v243 = vunpack.c.l.b16 %v208
        %v244 = vunpack.c.l.b16 %v209
        %v245 = vunpack.c.l.b16 %v210
        %v246 = vpack.c.b16 %v241, %v240
        %v247 = vpack.c.b16 %v243, %v242
        %v248 = vpack.c.b16 %v245, %v244
        %v268 = vunpack.c.l.b16 %v211
        %v269 = vunpack.c.l.b16 %v212
        %v270 = vunpack.c.l.b16 %v213
        %v271 = vunpack.c.l.b16 %v214
        %v272 = vunpack.c.l.b16 %v215
        %v273 = vunpack.c.l.b16 %v216
        %v274 = vunpack.c.l.b16 %v217
        %v275 = vunpack.c.l.b16 %v218
        %v276 = vunpack.c.l.b16 %v219
        %v277 = vunpack.c.l.b16 %v220
        %v278 = vunpack.c.l.b16 %v221
        %v279 = vunpack.c.l.b16 %v222
        %v280 = vunpack.c.l.b16 %v223
        %v281 = vunpack.c.l.b16 %v224
        %v282 = vunpack.c.l.b16 %v225
        %v283 = vunpack.c.l.b16 %v226
        %v284 = vpack.c.b16 %v269, %v268
        %v285 = vpack.c.b16 %v271, %v270
        %v286 = vpack.c.b16 %v273, %v272
        %v287 = vpack.c.b16 %v275, %v274
        %v288 = vpack.c.b16 %v277, %v276
        %v289 = vpack.c.b16 %v279, %v278
        %v290 = vpack.c.b16 %v281, %v280
        %v291 = vpack.c.b16 %v283, %v282
        %300 = vmatprep.subr.bf16.mxu0 0
        %301 = vmatpush1.bf16.msra.mxu0 %v284
        %302 = vmatprep.subr.bf16.mxu0 0
        %303 = vmatpush1.bf16.msra.mxu0 %v285
        %304 = vmatprep.subr.bf16.mxu0 0
        %305 = vmatpush1.bf16.msra.mxu0 %v286
        %306 = vmatprep.subr.bf16.mxu0 0
        %307 = vmatpush1.bf16.msra.mxu0 %v287
        %308 = vmatprep.subr.bf16.mxu0 0
        %309 = vmatpush1.bf16.msra.mxu0 %v288
        %310 = vmatprep.subr.bf16.mxu0 0
        %311 = vmatpush1.bf16.msra.mxu0 %v289
        %312 = vmatprep.subr.bf16.mxu0 0
        %313 = vmatpush1.bf16.msra.mxu0 %v290
        %314 = vmatprep.subr.bf16.mxu0 0
        %315 = vmatpush1.bf16.msra.mxu0 %v291
        %316 = vmatprep.subr.bf16.mxu0 0
        %317 = vmatpush1.bf16.msra.mxu0 0
        %318 = vmatprep.subr.bf16.mxu0 0
        %319 = vmatpush1.bf16.msra.mxu0 0
        %320 = vmatprep.subr.bf16.mxu0 0
        %321 = vmatpush1.bf16.msra.mxu0 0
        %322 = vmatprep.subr.bf16.mxu0 0
        %323 = vmatpush1.bf16.msra.mxu0 0
        %324 = vmatprep.subr.bf16.mxu0 0
        %325 = vmatpush1.bf16.msra.mxu0 0
        %326 = vmatprep.subr.bf16.mxu0 0
        %327 = vmatpush1.bf16.msra.mxu0 0
        %328 = vmatprep.subr.bf16.mxu0 0
        %329 = vmatpush1.bf16.msra.mxu0 0
        %330 = vmatprep.subr.bf16.mxu0 0
        %331 = vmatpush1.bf16.msra.mxu0 0
        %332 = vmatprep.mubr.bf16.mxu0 0
        %333 = vmatmul.mubr.bf16.gmra.mrb[0].mxu0 %v246
        %v334 = vpop.f32.mrb[0].mxu0
        %v335 = vadd.f32 %v232, %v334
        %v336 = vpop.f32.mrb[0].mxu0
        %v337 = vpop.f32.mrb[0].mxu0
        %v338 = vadd.f32 %v232, %v337
        %v339 = vpop.f32.mrb[0].mxu0
        %340 = vmatprep.mubr.bf16.mxu0 0
        %341 = vmatmul.mubr.bf16.gmra.mrb[0].mxu0 %v247
        %v342 = vpop.f32.mrb[0].mxu0
        %v343 = vadd.f32 %v232, %v342
        %v344 = vpop.f32.mrb[0].mxu0
        %v345 = vpop.f32.mrb[0].mxu0
        %v346 = vadd.f32 %v232, %v345
        %v347 = vpop.f32.mrb[0].mxu0
        %348 = vmatprep.mubr.bf16.mxu0 0
        %349 = vmatmul.mubr.bf16.gmra.mrb[0].mxu0 %v248
        %v350 = vpop.f32.mrb[0].mxu0
        %v351 = vadd.f32 %v232, %v350
        %v352 = vpop.f32.mrb[0].mxu0
        %v353 = vpop.f32.mrb[0].mxu0
        %v354 = vadd.f32 %v232, %v353
        %v355 = vpop.f32.mrb[0].mxu0
        %356 = vdwg.mxu0
        %v357 = vpack.c.bf16 %v338, %v335
        %v358 = vpack.c.bf16 %v346, %v343
        %v359 = vpack.c.bf16 %v354, %v351
        %v363 = vunpack.c.l.b16 %v357
        %v364 = vunpack.c.h.b16 %v357
        %v365 = vunpack.c.l.b16 %v358
        %v366 = vunpack.c.h.b16 %v358
        %v367 = vunpack.c.l.b16 %v359
        %v368 = vunpack.c.h.b16 %v359
        %v369 = vpack.c.b16 %v363, %v363
        %v370 = vpack.c.b16 %v364, %v364
        %v371 = vpack.c.b16 %v365, %v365
        %v372 = vpack.c.b16 %v366, %v366
        %v373 = vpack.c.b16 %v367, %v367
        %v374 = vpack.c.b16 %v368, %v368
        %381 = vst [vmem:[%s203] sm:$0xf] %v369
        %382 = vst [vmem:[%s203 + $0x4] sm:$0xf] %v370
        %383 = vst [vmem:[%s203 + $0x8] sm:$0xf] %v371
        %384 = vst [vmem:[%s203 + $0xc] sm:$0xf] %v372
        %385 = vst [vmem:[%s203 + $0x10] sm:$0xf] %v373
        %386 = vst [vmem:[%s203 + $0x14] sm:$0xf] %v374
        %s387 = sand.u32 %s97, 1
        %s388 = scalar_lea.sflag [#allocation4], %s387
        %s389 = sand.u32 %s97, 1
        %s390 = smul.addr %s389, 24
        %s391 = scalar_lea.vmem [#allocation7], %s390
        // Predicated region
        $region41: #{tpu_custom_call.1} parent=31 // pred_check
          %p392 = pneg %p107
        $region42: #{tpu_custom_call.1} parent=31 // pred_check_branch
          %394 = sbr.rel (%p392) target = $region44
        $region43: #{tpu_custom_call.1} parent=31 // pred_region
          %s396 = ssub.s32 384, 384
          %397 = vsyncadd %s388, %s396
          %s398 = smul.addr %s21, 6
          %s399 = smul.addr %s398, 64
          %s400 = scalar_lea.hbm %s3, %s399
          %s401 = sshll.u32 %s391, 4
          %s402 = int_to_ptr.vmem [resolvable:$true] %s401
          %407 = dma.vmem_to_hbm [thread:$0]  %s402, 384, %s400, %s388, 64, 64, 4
        $region44: #{tpu_custom_call.1} parent=31 // pred_fallthru
          _
      $region32: #{tpu_custom_call.1} parent=5 // pred_fallthru
        _
      %p408 = scmp.le.s32.totalorder 2, %s16
      // Predicated region
      $region45: #{tpu_custom_call.1} parent=5 // pred_check
        %p409 = pneg %p408
      $region46: #{tpu_custom_call.1} parent=5 // pred_check_branch
        %411 = sbr.rel (%p409) target = $region48
      $region47: #{tpu_custom_call.1} parent=5 // pred_region
        %s412 = ssub.s32 %s16, 2
        // Predicated region
        $region49: #{tpu_custom_call.1} parent=47 // pred_check
          %p413 = pneg %p113
        $region50: #{tpu_custom_call.1} parent=47 // pred_check_branch
          %415 = sbr.rel (%p413) target = $region52
        $region51: #{tpu_custom_call.1} parent=47 // pred_region
          %s416 = sand.u32 %s98, 1
          %s417 = scalar_lea.sflag [#allocation4], %s416
          %s418 = sand.u32 %s98, 1
          %s419 = smul.addr %s418, 24
          %s420 = scalar_lea.vmem [#allocation7], %s419
          %421 = dma.done %s417, 384
        $region52: #{tpu_custom_call.1} parent=47 // pred_fallthru
          _
      $region48: #{tpu_custom_call.1} parent=5 // pred_fallthru
        _
    $region6: #{tpu_custom_call.1} parent=1 // loop_footer
      %s20 = sadd.s32 1, %s16
    $region7: #{tpu_custom_call.1} parent=1 // loop_footer_branch
      %15 = sbr.rel target = $region3
    $region8: #{tpu_custom_call.1} parent=1 // loop_exit
      _
    %422 = vsyncpa [#allocation3], 1
    %s423 = scalar_lea.sflag [#allocation3], 1
    %424 = vsyncpa %s423, 1
    %425 = vsyncpa [#allocation6], 1
    %426 = vsyncpa [#allocation4], 1
    %s427 = scalar_lea.sflag [#allocation4], 1
    %428 = vsyncpa %s427, 1

</llo_original>
